<compile_context>
chip_gen: v7x
topology: tpu7x:2x2x1
jax: 0.10.0
libtpu: 0.0.40
codegen_flags: <defaults>
</compile_context>

<pallas_src>
import jax
import jax.numpy as jnp
from jax.experimental import pallas as pl
from jax.experimental.pallas import tpu as pltpu

LANE = 128          # lane width: pad feature dims to multiples of this
SUBLANE_BF16 = 16   # bf16 packs 2 rows / sublane -> batch tiles are multiples of 16


def _round_up(x, m):
    return ((x + m - 1) // m) * m


def _sigmoid(v):
    # exp -> EUP; approx reciprocal -> EUP.  Keeps the VALU slot free vs jax.nn.sigmoid's divide.
    return pl.reciprocal(1.0 + jnp.exp(-v), approx=True)


def _three_layer_kernel(x_ref, w1_ref, b1_ref, w2_ref, b2_ref, w3_ref, b3_ref, o_ref):
    """One batch tile: sigmoid(sigmoid(x@W1+b1)@W2+b2)@W3+b3.

    bf16 matmul operands, f32 accumulation / bias / sigmoid, bf16 store.
    """
    h1 = jnp.dot(x_ref[...], w1_ref[...], preferred_element_type=jnp.float32) + b1_ref[...]
    h1 = _sigmoid(h1)
    h2 = jnp.dot(h1.astype(jnp.bfloat16), w2_ref[...],
                 preferred_element_type=jnp.float32) + b2_ref[...]
    h2 = _sigmoid(h2)
    out = jnp.dot(h2.astype(jnp.bfloat16), w3_ref[...],
                  preferred_element_type=jnp.float32) + b3_ref[...]
    o_ref[...] = out.astype(o_ref.dtype)


def prepare_params(w1, b1, w2, b2, w3, b3):
    """One-time prep: zero-pad feature dims to 128 lanes and cast weights to bf16.

    Weights are (in_features, out_features), i.e. transposed vs PyTorch.  Zero-padded weight
    rows annihilate the sigmoid(0)=0.5 values living in padded hidden lanes, and padded output
    lanes/rows are sliced off by the wrapper.
    """
    in_size, nh1 = w1.shape
    nh2 = w2.shape[1]
    out_size = w3.shape[1]
    in_p = _round_up(in_size, LANE)
    nh1_p = _round_up(nh1, LANE)
    nh2_p = _round_up(nh2, LANE)
    out_p = _round_up(out_size, LANE)

    def pad_w(w, rows, cols):
        return (jnp.zeros((rows, cols), jnp.bfloat16)
                .at[: w.shape[0], : w.shape[1]].set(w.astype(jnp.bfloat16)))

    def pad_b(b, cols):
        b2d = b.astype(jnp.float32).reshape(1, -1)
        return jnp.zeros((1, cols), jnp.float32).at[:, : b2d.shape[1]].set(b2d)

    return dict(
        w1=pad_w(w1, in_p, nh1_p), b1=pad_b(b1, nh1_p),
        w2=pad_w(w2, nh1_p, nh2_p), b2=pad_b(b2, nh2_p),
        w3=pad_w(w3, nh2_p, out_p), b3=pad_b(b3, out_p),
        in_size=in_size, out_size=out_size,
    )


def _pick_batch_tile(B, block_b):
    """Largest batch tile that is a multiple of 16, <= block_b, and (when the batch allows it)
    still yields >= 2 grid steps so megacore on v7x has something to shard."""
    b_aligned = _round_up(max(B, 1), SUBLANE_BF16)
    tb_cap = max(_round_up(min(block_b, b_aligned), SUBLANE_BF16), SUBLANE_BF16)
    if b_aligned >= 2 * SUBLANE_BF16:
        half = _round_up(pl.cdiv(b_aligned, 2), SUBLANE_BF16)
        tb = min(tb_cap, half)
    else:
        tb = tb_cap
    b_p = _round_up(b_aligned, tb)
    return tb, b_p


def three_layer_net(x, params, *, block_b=512):
    """x: (B, input_size) f32 or bf16; params: output of prepare_params.

    Returns (B, output_size) f32.
    """
    B, in_size = x.shape
    assert in_size == params["in_size"], (in_size, params["in_size"])
    out_size = params["out_size"]
    w1p, b1p = params["w1"], params["b1"]
    w2p, b2p = params["w2"], params["b2"]
    w3p, b3p = params["w3"], params["b3"]
    in_p, nh1_p = w1p.shape
    nh2_p = w2p.shape[1]
    out_p = w3p.shape[1]

    tb, b_p = _pick_batch_tile(B, block_b)
    grid = (b_p // tb,)

    # Repack x only when its shape/dtype requires it (a per-call pad/cast pass is an extra full
    # HBM round trip on a memory-bound kernel).
    xb = x if x.dtype == jnp.bfloat16 else x.astype(jnp.bfloat16)
    if (B, in_size) != (b_p, in_p):
        xp = jnp.zeros((b_p, in_p), jnp.bfloat16).at[:B, :in_size].set(xb)
    else:
        xp = xb

    # VMEM budget: double-buffered x/out streams + (default double-buffered) resident
    # weights/biases + intermediates, with ~30% headroom, clamped to v7x's 64 MiB per TC.
    weight_bytes = 2 * (in_p * nh1_p + nh1_p * nh2_p + nh2_p * out_p)   # bf16 weights
    bias_bytes = 4 * (nh1_p + nh2_p + out_p)                            # f32 biases
    stream_bytes = 2 * tb * (in_p + out_p) * 2                          # bf16 x/out, 2 bufs each
    interm_bytes = tb * (nh1_p + nh2_p) * (4 + 2)                       # f32 h + bf16 cast copy
    est = 2 * (weight_bytes + bias_bytes) + stream_bytes + interm_bytes
    vmem_limit = min(max(int(est * 1.3) + (4 << 20), 16 << 20), 64 << 20)

    cost = pl.CostEstimate(
        flops=2 * b_p * (in_p * nh1_p + nh1_p * nh2_p + nh2_p * out_p),
        transcendentals=b_p * (nh1_p + nh2_p),
        bytes_accessed=(xp.size * 2 + weight_bytes + bias_bytes + b_p * out_p * 2),
    )

    out_padded = pl.pallas_call(
        _three_layer_kernel,
        out_shape=jax.ShapeDtypeStruct((b_p, out_p), jnp.bfloat16),   # bf16 store: half the HBM
        grid=grid,
        in_specs=[
            pl.BlockSpec((tb, in_p), lambda i: (i, 0)),       # x: streamed over batch tiles
            pl.BlockSpec((in_p, nh1_p), lambda i: (0, 0)),    # weights/biases: VMEM-resident
            pl.BlockSpec((1, nh1_p), lambda i: (0, 0)),
            pl.BlockSpec((nh1_p, nh2_p), lambda i: (0, 0)),
            pl.BlockSpec((1, nh2_p), lambda i: (0, 0)),
            pl.BlockSpec((nh2_p, out_p), lambda i: (0, 0)),
            pl.BlockSpec((1, out_p), lambda i: (0, 0)),
        ],
        out_specs=pl.BlockSpec((tb, out_p), lambda i: (i, 0)),
        compiler_params=pltpu.CompilerParams(
            dimension_semantics=("parallel",),
            vmem_limit_bytes=vmem_limit,
        ),
        cost_estimate=cost,
    )(xp, w1p, b1p, w2p, b2p, w3p, b3p)

    return out_padded[:B, :out_size].astype(jnp.float32)


def init_params(key, input_size, output_size, nh_1, nh_2, init_low, init_high):
    """Mirrors ThreeLayerNet.initialize_weights: weights ~ U(lo, hi), biases = 0.
    Weights stored transposed vs PyTorch, i.e. (in_features, out_features)."""
    k1, k2, k3 = jax.random.split(key, 3)
    w1 = jax.random.uniform(k1, (input_size, nh_1), jnp.float32, init_low, init_high)
    w2 = jax.random.uniform(k2, (nh_1, nh_2), jnp.float32, init_low, init_high)
    w3 = jax.random.uniform(k3, (nh_2, output_size), jnp.float32, init_low, init_high)
    b1 = jnp.zeros((1, nh_1), jnp.float32)
    b2 = jnp.zeros((1, nh_2), jnp.float32)
    b3 = jnp.zeros((1, output_size), jnp.float32)
    return w1, b1, w2, b2, w3, b3


if __name__ == "__main__":
    # Small demo shapes consistent with the module: (batch, input_size) -> (batch, output_size).
    # At this size the kernel is pure launch/DMA overhead; the tiling / bf16 / padding choices
    # above are aimed at realistic batch and feature sizes.
    batch = 8
    input_size = 16
    nh_1 = 32
    nh_2 = 32
    output_size = 8
    init_low, init_high = -0.1, 0.1

    key = jax.random.PRNGKey(0)
    kx, kp = jax.random.split(key)
    x = jax.random.normal(kx, (batch, input_size), jnp.float32)
    raw = init_params(kp, input_size, output_size, nh_1, nh_2, init_low, init_high)

    # One-time parameter prep (pad + bf16 cast) hoisted out of the per-call path.
    prepped = prepare_params(*raw)

    out = three_layer_net(x, prepped)
    out = jax.block_until_ready(out)

    # Reference in plain f32 JAX; loose tolerance is a deliberate precision trade-off: matmul
    # operands, the final store and the sigmoid reciprocal are bf16 / approx in the kernel.
    w1, b1, w2, b2, w3, b3 = raw
    ref = jax.nn.sigmoid(x @ w1 + b1)
    ref = jax.nn.sigmoid(ref @ w2 + b2)
    ref = ref @ w3 + b3
    assert out.shape == (batch, output_size), out.shape
    assert jnp.allclose(out, ref, atol=5e-2, rtol=5e-2), float(jnp.max(jnp.abs(out - ref)))

    print("KERNEL_OK")
</pallas_src>

<mosaic_0001>
module attributes {stable_mosaic.version = 11 : i64} {
  func.func @_three_layer_kernel(%arg0: i32, %arg1: memref<16x128xbf16, #tpu.memory_space<vmem>>, %arg2: memref<128x128xbf16, #tpu.memory_space<vmem>>, %arg3: memref<1x128xf32, #tpu.memory_space<vmem>>, %arg4: memref<128x128xbf16, #tpu.memory_space<vmem>>, %arg5: memref<1x128xf32, #tpu.memory_space<vmem>>, %arg6: memref<128x128xbf16, #tpu.memory_space<vmem>>, %arg7: memref<1x128xf32, #tpu.memory_space<vmem>>, %arg8: memref<16x128xbf16, #tpu.memory_space<vmem>>) attributes {dimension_semantics = [#tpu.dimension_semantics<parallel>], iteration_bounds = array<i64: 1>, scalar_prefetch = 0 : i64, scratch_operands = 0 : i64, tpu.core_type = #tpu.core_type<tc>, window_params = [{transform_indices = @transform_0, window_bounds = array<i64: 16, 128>}, {pipeline_mode = #tpu.pipeline_mode<synchronous>, transform_indices = @transform_1, window_bounds = array<i64: 128, 128>}, {pipeline_mode = #tpu.pipeline_mode<synchronous>, transform_indices = @transform_2, window_bounds = array<i64: 1, 128>}, {pipeline_mode = #tpu.pipeline_mode<synchronous>, transform_indices = @transform_3, window_bounds = array<i64: 128, 128>}, {pipeline_mode = #tpu.pipeline_mode<synchronous>, transform_indices = @transform_4, window_bounds = array<i64: 1, 128>}, {pipeline_mode = #tpu.pipeline_mode<synchronous>, transform_indices = @transform_5, window_bounds = array<i64: 128, 128>}, {pipeline_mode = #tpu.pipeline_mode<synchronous>, transform_indices = @transform_6, window_bounds = array<i64: 1, 128>}, {transform_indices = @transform_7, window_bounds = array<i64: 16, 128>}]} {
    %c0 = arith.constant 0 : index
    %c0_0 = arith.constant 0 : index
    %0 = vector.load %arg1[%c0, %c0_0] : memref<16x128xbf16, #tpu.memory_space<vmem>>, vector<16x128xbf16>
    %c0_1 = arith.constant 0 : index
    %c0_2 = arith.constant 0 : index
    %1 = vector.load %arg2[%c0_1, %c0_2] : memref<128x128xbf16, #tpu.memory_space<vmem>>, vector<128x128xbf16>
    %cst = arith.constant dense<0.000000e+00> : vector<16x128xf32>
    %2 = tpu.matmul %0, %1, %cst {dimension_numbers = #tpu.dot_dimension_numbers<[1], [0], [0], [1], [0, 0, 1, 1], [], []>} : vector<16x128xbf16>, vector<128x128xbf16>, vector<16x128xf32> -> vector<16x128xf32>
    %c0_3 = arith.constant 0 : index
    %c0_4 = arith.constant 0 : index
    %3 = vector.load %arg3[%c0_3, %c0_4] : memref<1x128xf32, #tpu.memory_space<vmem>>, vector<1x128xf32>
    %4 = vector.broadcast %3 : vector<1x128xf32> to vector<16x128xf32>
    %5 = arith.addf %2, %4 : vector<16x128xf32>
    %cst_5 = arith.constant 0.000000e+00 : f32
    %6 = vector.broadcast %cst_5 : f32 to vector<16x128xf32>
    %7 = arith.subf %6, %5 : vector<16x128xf32>
    %8 = math.exp %7 : vector<16x128xf32>
    %cst_6 = arith.constant 1.000000e+00 : f32
    %9 = vector.broadcast %cst_6 : f32 to vector<16x128xf32>
    %10 = arith.addf %9, %8 : vector<16x128xf32>
    %11 = tpu.reciprocal %10 {approx = true} : vector<16x128xf32> -> vector<16x128xf32>
    %12 = arith.truncf %11 : vector<16x128xf32> to vector<16x128xbf16>
    %c0_7 = arith.constant 0 : index
    %c0_8 = arith.constant 0 : index
    %13 = vector.load %arg4[%c0_7, %c0_8] : memref<128x128xbf16, #tpu.memory_space<vmem>>, vector<128x128xbf16>
    %cst_9 = arith.constant dense<0.000000e+00> : vector<16x128xf32>
    %14 = tpu.matmul %12, %13, %cst_9 {dimension_numbers = #tpu.dot_dimension_numbers<[1], [0], [0], [1], [0, 0, 1, 1], [], []>} : vector<16x128xbf16>, vector<128x128xbf16>, vector<16x128xf32> -> vector<16x128xf32>
    %c0_10 = arith.constant 0 : index
    %c0_11 = arith.constant 0 : index
    %15 = vector.load %arg5[%c0_10, %c0_11] : memref<1x128xf32, #tpu.memory_space<vmem>>, vector<1x128xf32>
    %16 = vector.broadcast %15 : vector<1x128xf32> to vector<16x128xf32>
    %17 = arith.addf %14, %16 : vector<16x128xf32>
    %cst_12 = arith.constant 0.000000e+00 : f32
    %18 = vector.broadcast %cst_12 : f32 to vector<16x128xf32>
    %19 = arith.subf %18, %17 : vector<16x128xf32>
    %20 = math.exp %19 : vector<16x128xf32>
    %cst_13 = arith.constant 1.000000e+00 : f32
    %21 = vector.broadcast %cst_13 : f32 to vector<16x128xf32>
    %22 = arith.addf %21, %20 : vector<16x128xf32>
    %23 = tpu.reciprocal %22 {approx = true} : vector<16x128xf32> -> vector<16x128xf32>
    %24 = arith.truncf %23 : vector<16x128xf32> to vector<16x128xbf16>
    %c0_14 = arith.constant 0 : index
    %c0_15 = arith.constant 0 : index
    %25 = vector.load %arg6[%c0_14, %c0_15] : memref<128x128xbf16, #tpu.memory_space<vmem>>, vector<128x128xbf16>
    %cst_16 = arith.constant dense<0.000000e+00> : vector<16x128xf32>
    %26 = tpu.matmul %24, %25, %cst_16 {dimension_numbers = #tpu.dot_dimension_numbers<[1], [0], [0], [1], [0, 0, 1, 1], [], []>} : vector<16x128xbf16>, vector<128x128xbf16>, vector<16x128xf32> -> vector<16x128xf32>
    %c0_17 = arith.constant 0 : index
    %c0_18 = arith.constant 0 : index
    %27 = vector.load %arg7[%c0_17, %c0_18] : memref<1x128xf32, #tpu.memory_space<vmem>>, vector<1x128xf32>
    %28 = vector.broadcast %27 : vector<1x128xf32> to vector<16x128xf32>
    %29 = arith.addf %26, %28 : vector<16x128xf32>
    %30 = arith.truncf %29 : vector<16x128xf32> to vector<16x128xbf16>
    %c0_19 = arith.constant 0 : index
    %c0_20 = arith.constant 0 : index
    %31 = vector.load %arg8[%c0_19, %c0_20] : memref<16x128xbf16, #tpu.memory_space<vmem>>, vector<16x128xbf16>
    tpu.vector_store %arg8[%c0_19, %c0_20], %30 {strides = array<i32>} : memref<16x128xbf16, #tpu.memory_space<vmem>>, vector<16x128xbf16>,
    return
  }
  func.func @transform_0(%arg0: i32) -> (i32, i32) {
    %c0_i32 = arith.constant 0 : i32
    %c0_i32_0 = arith.constant 0 : i32
    return %arg0, %c0_i32 : i32, i32
  }
  func.func @transform_1(%arg0: i32) -> (i32, i32) {
    %c0_i32 = arith.constant 0 : i32
    %c0_i32_0 = arith.constant 0 : i32
    %c0_i32_1 = arith.constant 0 : i32
    return %c0_i32, %c0_i32_0 : i32, i32
  }
  func.func @transform_2(%arg0: i32) -> (i32, i32) {
    %c0_i32 = arith.constant 0 : i32
    %c0_i32_0 = arith.constant 0 : i32
    %c0_i32_1 = arith.constant 0 : i32
    return %c0_i32, %c0_i32_0 : i32, i32
  }
  func.func @transform_3(%arg0: i32) -> (i32, i32) {
    %c0_i32 = arith.constant 0 : i32
    %c0_i32_0 = arith.constant 0 : i32
    %c0_i32_1 = arith.constant 0 : i32
    return %c0_i32, %c0_i32_0 : i32, i32
  }
  func.func @transform_4(%arg0: i32) -> (i32, i32) {
    %c0_i32 = arith.constant 0 : i32
    %c0_i32_0 = arith.constant 0 : i32
    %c0_i32_1 = arith.constant 0 : i32
    return %c0_i32, %c0_i32_0 : i32, i32
  }
  func.func @transform_5(%arg0: i32) -> (i32, i32) {
    %c0_i32 = arith.constant 0 : i32
    %c0_i32_0 = arith.constant 0 : i32
    %c0_i32_1 = arith.constant 0 : i32
    return %c0_i32, %c0_i32_0 : i32, i32
  }
  func.func @transform_6(%arg0: i32) -> (i32, i32) {
    %c0_i32 = arith.constant 0 : i32
    %c0_i32_0 = arith.constant 0 : i32
    %c0_i32_1 = arith.constant 0 : i32
    return %c0_i32, %c0_i32_0 : i32, i32
  }
  func.func @transform_7(%arg0: i32) -> (i32, i32) {
    %c0_i32 = arith.constant 0 : i32
    %c0_i32_0 = arith.constant 0 : i32
    return %arg0, %c0_i32 : i32, i32
  }
}

</mosaic_0001>

<llo_original>
// kernel: tpu_custom_call.1
$region0: #{tpu_custom_call.1}
  #allocation0 [shape = 'u32[]', space=smem, size = 0x4, offset = 0x4, fixed_abs, tag = 'smem constant byte address 0x4 - core index']
  #allocation1 [shape = 'u32[144,128]{1,0:T(1,128)}', space=vmem, size = 0x12000, scoped, tag = 'internal scratch']
  %s0 = inlined_call_operand.hbm [shape: bf16[16,128], index: 0, kind: input, shape index: {}]
  %s1 = inlined_call_operand.hbm [shape: bf16[128,128], index: 1, kind: input, shape index: {}]
  %s2 = inlined_call_operand.vmem [shape: f32[1,128], index: 2, kind: input, shape index: {}]
  %s3 = inlined_call_operand.hbm [shape: bf16[128,128], index: 3, kind: input, shape index: {}]
  %s4 = inlined_call_operand.vmem [shape: f32[1,128], index: 4, kind: input, shape index: {}]
  %s5 = inlined_call_operand.hbm [shape: bf16[128,128], index: 5, kind: input, shape index: {}]
  %s6 = inlined_call_operand.vmem [shape: f32[1,128], index: 6, kind: input, shape index: {}]
  %s7 = inlined_call_operand.hbm [shape: bf16[16,128], index: 7, kind: output, shape index: {}]
  %s8 = sld [smem:[#allocation0]]
  $region54: #{tpu_custom_call.1} parent=0
    _
  %s10 = ssub.s32 1, %s8
  %s11 = scalar_select 0, %s10, %s8
  $region1: #{tpu_custom_call.1} parent=0
    #allocation2 [shape = 'u8[4096]{0}', space=vmem, size = 0x1000, scoped, tag = 'input window, operand 0, single buffered']
    #allocation3 [shape = 's32[1]{0}', space=sflag, size = 0x4, scoped, tag = 'scoped memory for tpu_custom_call.1']
    #allocation4 [shape = 's32[1]{0}', space=sflag, size = 0x4, scoped, tag = 'scoped memory for tpu_custom_call.1']
    #allocation5 [shape = 'u8[32768]{0}', space=vmem, size = 0x8000, scoped, tag = 'input window, operand 1, single buffered']
    #allocation6 [shape = 's32[1]{0}', space=sflag, size = 0x4, scoped, tag = 'scoped memory for tpu_custom_call.1']
    #allocation7 [shape = 'u8[32768]{0}', space=vmem, size = 0x8000, scoped, tag = 'input window, operand 3, single buffered']
    #allocation8 [shape = 'u8[32768]{0}', space=vmem, size = 0x8000, scoped, tag = 'input window, operand 5, single buffered']
    #allocation9 [shape = 's32[1]{0}', space=sflag, size = 0x4, scoped, tag = 'scoped memory for tpu_custom_call.1']
    #allocation10 [shape = 'u8[4096]{0}', space=vmem, size = 0x1000, scoped, tag = 'output window, operand 0, single buffered']
    %12 = vsyncpa [#allocation3], 0
    %13 = vsyncpa [#allocation6], 0
    %14 = vsyncpa [#allocation9], 0
    %15 = vsyncpa [#allocation4], 0
    // Predicated region
    $region2: #{tpu_custom_call.1} parent=1 // pred_check
      _
    $region3: #{tpu_custom_call.1} parent=1 // pred_check_branch
      %17 = sbr.rel (0) target = $region5
    $region4: #{tpu_custom_call.1} parent=1 // pred_region
      %s19 = ssub.s32 128, 128
      %20 = vsyncadd [#allocation3], %s19
      %s21 = sshll.u32 [#allocation2], 4
      %s22 = int_to_ptr.vmem [resolvable:$true] %s21
      %27 = dma.hbm_to_vmem [thread:$0]  %s0, 128, %s22, [#allocation3], 64, 64, 4
    $region5: #{tpu_custom_call.1} parent=1 // pred_fallthru
      _
    // Predicated region
    $region6: #{tpu_custom_call.1} parent=1 // pred_check
      _
    $region7: #{tpu_custom_call.1} parent=1 // pred_check_branch
      %29 = sbr.rel (0) target = $region9
    $region8: #{tpu_custom_call.1} parent=1 // pred_region
      %s31 = ssub.s32 1024, 1024
      %32 = vsyncadd [#allocation6], %s31
      %s33 = sshll.u32 [#allocation5], 4
      %s34 = int_to_ptr.vmem [resolvable:$true] %s33
      %39 = dma.hbm_to_vmem [thread:$0]  %s1, 1024, %s34, [#allocation6], 64, 64, 4
    $region9: #{tpu_custom_call.1} parent=1 // pred_fallthru
      _
    // Predicated region
    $region10: #{tpu_custom_call.1} parent=1 // pred_check
      _
    $region11: #{tpu_custom_call.1} parent=1 // pred_check_branch
      %41 = sbr.rel (0) target = $region13
    $region12: #{tpu_custom_call.1} parent=1 // pred_region
      _
    $region13: #{tpu_custom_call.1} parent=1 // pred_fallthru
      _
    // Predicated region
    $region14: #{tpu_custom_call.1} parent=1 // pred_check
      _
    $region15: #{tpu_custom_call.1} parent=1 // pred_check_branch
      %43 = sbr.rel (0) target = $region17
    $region16: #{tpu_custom_call.1} parent=1 // pred_region
      %s45 = ssub.s32 1024, 1024
      %46 = vsyncadd [#allocation6], %s45
      %s47 = sshll.u32 [#allocation7], 4
      %s48 = int_to_ptr.vmem [resolvable:$true] %s47
      %53 = dma.hbm_to_vmem [thread:$0]  %s3, 1024, %s48, [#allocation6], 64, 64, 4
    $region17: #{tpu_custom_call.1} parent=1 // pred_fallthru
      _
    // Predicated region
    $region18: #{tpu_custom_call.1} parent=1 // pred_check
      _
    $region19: #{tpu_custom_call.1} parent=1 // pred_check_branch
      %55 = sbr.rel (0) target = $region21
    $region20: #{tpu_custom_call.1} parent=1 // pred_region
      _
    $region21: #{tpu_custom_call.1} parent=1 // pred_fallthru
      _
    // Predicated region
    $region22: #{tpu_custom_call.1} parent=1 // pred_check
      _
    $region23: #{tpu_custom_call.1} parent=1 // pred_check_branch
      %57 = sbr.rel (0) target = $region25
    $region24: #{tpu_custom_call.1} parent=1 // pred_region
      %s59 = ssub.s32 1024, 1024
      %60 = vsyncadd [#allocation9], %s59
      %s61 = sshll.u32 [#allocation8], 4
      %s62 = int_to_ptr.vmem [resolvable:$true] %s61
      %67 = dma.hbm_to_vmem [thread:$0]  %s5, 1024, %s62, [#allocation9], 64, 64, 4
    $region25: #{tpu_custom_call.1} parent=1 // pred_fallthru
      _
    // Predicated region
    $region26: #{tpu_custom_call.1} parent=1 // pred_check
      _
    $region27: #{tpu_custom_call.1} parent=1 // pred_check_branch
      %69 = sbr.rel (0) target = $region29
    $region28: #{tpu_custom_call.1} parent=1 // pred_region
      _
    $region29: #{tpu_custom_call.1} parent=1 // pred_fallthru
      _
    // Predicated region
    $region30: #{tpu_custom_call.1} parent=1 // pred_check
      _
    $region31: #{tpu_custom_call.1} parent=1 // pred_check_branch
      %71 = sbr.rel (0) target = $region33
    $region32: #{tpu_custom_call.1} parent=1 // pred_region
      %72 = dma.done [#allocation3], 128
    $region33: #{tpu_custom_call.1} parent=1 // pred_fallthru
      _
    // Predicated region
    $region34: #{tpu_custom_call.1} parent=1 // pred_check
      _
    $region35: #{tpu_custom_call.1} parent=1 // pred_check_branch
      %74 = sbr.rel (0) target = $region37
    $region36: #{tpu_custom_call.1} parent=1 // pred_region
      %75 = dma.done [#allocation6], 1024
    $region37: #{tpu_custom_call.1} parent=1 // pred_fallthru
      _
    // Predicated region
    $region38: #{tpu_custom_call.1} parent=1 // pred_check
      _
    $region39: #{tpu_custom_call.1} parent=1 // pred_check_branch
      %77 = sbr.rel (0) target = $region41
    $region40: #{tpu_custom_call.1} parent=1 // pred_region
      %78 = dma.done [#allocation6], 1024
    $region41: #{tpu_custom_call.1} parent=1 // pred_fallthru
      _
    // Predicated region
    $region42: #{tpu_custom_call.1} parent=1 // pred_check
      _
    $region43: #{tpu_custom_call.1} parent=1 // pred_check_branch
      %80 = sbr.rel (0) target = $region45
    $region44: #{tpu_custom_call.1} parent=1 // pred_region
      %81 = dma.done [#allocation9], 1024
    $region45: #{tpu_custom_call.1} parent=1 // pred_fallthru
      _
    %v83 = vld [vmem:[#allocation2] sm:$0xf]
    %v84 = vld [vmem:[#allocation2 + $0x4] sm:$0xf]
    %v85 = vld [vmem:[#allocation5] sm:$0xf]
    %v86 = vld [vmem:[#allocation5 + $0x4] sm:$0xf]
    %v87 = vld [vmem:[#allocation5 + $0x8] sm:$0xf]
    %v88 = vld [vmem:[#allocation5 + $0xc] sm:$0xf]
    %v89 = vld [vmem:[#allocation5 + $0x10] sm:$0xf]
    %v90 = vld [vmem:[#allocation5 + $0x14] sm:$0xf]
    %v91 = vld [vmem:[#allocation5 + $0x18] sm:$0xf]
    %v92 = vld [vmem:[#allocation5 + $0x1c] sm:$0xf]
    %v93 = vld [vmem:[#allocation5 + $0x20] sm:$0xf]
    %v94 = vld [vmem:[#allocation5 + $0x24] sm:$0xf]
    %v95 = vld [vmem:[#allocation5 + $0x28] sm:$0xf]
    %v96 = vld [vmem:[#allocation5 + $0x2c] sm:$0xf]
    %v97 = vld [vmem:[#allocation5 + $0x30] sm:$0xf]
    %v98 = vld [vmem:[#allocation5 + $0x34] sm:$0xf]
    %v99 = vld [vmem:[#allocation5 + $0x38] sm:$0xf]
    %v100 = vld [vmem:[#allocation5 + $0x3c] sm:$0xf]
    %v101 = vld [vmem:[%s2] sm:$0x1]
    %v103 = vlaneseq
    %v104 = vshrl.u32 %v103, 7
    %v105 = vsub.s32 0, %v104
    %v106 = vrot.slane %v101, %v105
    %v110 = vunpack.c.l.b16 %v83
    %v111 = vunpack.c.l.b16 %v84
    %v112 = vpack.c.b16 %v111, %v110
    %v130 = vunpack.c.l.b16 %v85
    %v131 = vunpack.c.l.b16 %v86
    %v132 = vunpack.c.l.b16 %v87
    %v133 = vunpack.c.l.b16 %v88
    %v134 = vunpack.c.l.b16 %v89
    %v135 = vunpack.c.l.b16 %v90
    %v136 = vunpack.c.l.b16 %v91
    %v137 = vunpack.c.l.b16 %v92
    %v138 = vunpack.c.l.b16 %v93
    %v139 = vunpack.c.l.b16 %v94
    %v140 = vunpack.c.l.b16 %v95
    %v141 = vunpack.c.l.b16 %v96
    %v142 = vunpack.c.l.b16 %v97
    %v143 = vunpack.c.l.b16 %v98
    %v144 = vunpack.c.l.b16 %v99
    %v145 = vunpack.c.l.b16 %v100
    %v146 = vpack.c.b16 %v131, %v130
    %v147 = vpack.c.b16 %v133, %v132
    %v148 = vpack.c.b16 %v135, %v134
    %v149 = vpack.c.b16 %v137, %v136
    %v150 = vpack.c.b16 %v139, %v138
    %v151 = vpack.c.b16 %v141, %v140
    %v152 = vpack.c.b16 %v143, %v142
    %v153 = vpack.c.b16 %v145, %v144
    %162 = vmatprep.subr.bf16.mxu0 0
    %163 = vmatpush1.bf16.msra.mxu0 %v146
    %164 = vmatprep.subr.bf16.mxu0 0
    %165 = vmatpush1.bf16.msra.mxu0 %v147
    %166 = vmatprep.subr.bf16.mxu0 0
    %167 = vmatpush1.bf16.msra.mxu0 %v148
    %168 = vmatprep.subr.bf16.mxu0 0
    %169 = vmatpush1.bf16.msra.mxu0 %v149
    %170 = vmatprep.subr.bf16.mxu0 0
    %171 = vmatpush1.bf16.msra.mxu0 %v150
    %172 = vmatprep.subr.bf16.mxu0 0
    %173 = vmatpush1.bf16.msra.mxu0 %v151
    %174 = vmatprep.subr.bf16.mxu0 0
    %175 = vmatpush1.bf16.msra.mxu0 %v152
    %176 = vmatprep.subr.bf16.mxu0 0
    %177 = vmatpush1.bf16.msra.mxu0 %v153
    %178 = vmatprep.subr.bf16.mxu0 0
    %179 = vmatpush1.bf16.msra.mxu0 0
    %180 = vmatprep.subr.bf16.mxu0 0
    %181 = vmatpush1.bf16.msra.mxu0 0
    %182 = vmatprep.subr.bf16.mxu0 0
    %183 = vmatpush1.bf16.msra.mxu0 0
    %184 = vmatprep.subr.bf16.mxu0 0
    %185 = vmatpush1.bf16.msra.mxu0 0
    %186 = vmatprep.subr.bf16.mxu0 0
    %187 = vmatpush1.bf16.msra.mxu0 0
    %188 = vmatprep.subr.bf16.mxu0 0
    %189 = vmatpush1.bf16.msra.mxu0 0
    %190 = vmatprep.subr.bf16.mxu0 0
    %191 = vmatpush1.bf16.msra.mxu0 0
    %192 = vmatprep.subr.bf16.mxu0 0
    %193 = vmatpush1.bf16.msra.mxu0 0
    %194 = vmatprep.mubr.bf16.mxu0 0
    %195 = vmatmul.mubr.bf16.gmra.mrb[0].mxu0 %v112
    %v196 = vpop.f32.mrb[0].mxu0
    %v197 = vadd.f32 %v106, %v196
    %v198 = vpop.f32.mrb[0].mxu0
    %v199 = vpop.f32.mrb[0].mxu0
    %v200 = vadd.f32 %v106, %v199
    %v201 = vpop.f32.mrb[0].mxu0
    %202 = vdwg.mxu0
    %v203 = vsub.f32 0.0, %v197
    %v204 = vsub.f32 0.0, %v200
    %v205 = vmul.f32 %v203, 1.442695
    %v206 = vpow.pop %v205
    %v207 = vmul.f32 %v204, 1.442695
    %v208 = vpow.pop %v207
    %v209 = vadd.f32 %v206, 1.0
    %v210 = vadd.f32 %v208, 1.0
    %v211 = vrcp.pop %v209
    %v212 = vrcp.pop %v210
    %v213 = vpack.c.bf16 %v212, %v211
    %v214 = vld [vmem:[#allocation7] sm:$0xf]
    %v215 = vld [vmem:[#allocation7 + $0x4] sm:$0xf]
    %v216 = vld [vmem:[#allocation7 + $0x8] sm:$0xf]
    %v217 = vld [vmem:[#allocation7 + $0xc] sm:$0xf]
    %v218 = vld [vmem:[#allocation7 + $0x10] sm:$0xf]
    %v219 = vld [vmem:[#allocation7 + $0x14] sm:$0xf]
    %v220 = vld [vmem:[#allocation7 + $0x18] sm:$0xf]
    %v221 = vld [vmem:[#allocation7 + $0x1c] sm:$0xf]
    %v222 = vld [vmem:[#allocation7 + $0x20] sm:$0xf]
    %v223 = vld [vmem:[#allocation7 + $0x24] sm:$0xf]
    %v224 = vld [vmem:[#allocation7 + $0x28] sm:$0xf]
    %v225 = vld [vmem:[#allocation7 + $0x2c] sm:$0xf]
    %v226 = vld [vmem:[#allocation7 + $0x30] sm:$0xf]
    %v227 = vld [vmem:[#allocation7 + $0x34] sm:$0xf]
    %v228 = vld [vmem:[#allocation7 + $0x38] sm:$0xf]
    %v229 = vld [vmem:[#allocation7 + $0x3c] sm:$0xf]
    %v230 = vld [vmem:[%s4] sm:$0x1]
    %v232 = vlaneseq
    %v233 = vshrl.u32 %v232, 7
    %v234 = vsub.s32 0, %v233
    %v235 = vrot.slane %v230, %v234
    %v253 = vunpack.c.l.b16 %v214
    %v254 = vunpack.c.l.b16 %v215
    %v255 = vunpack.c.l.b16 %v216
    %v256 = vunpack.c.l.b16 %v217
    %v257 = vunpack.c.l.b16 %v218
    %v258 = vunpack.c.l.b16 %v219
    %v259 = vunpack.c.l.b16 %v220
    %v260 = vunpack.c.l.b16 %v221
    %v261 = vunpack.c.l.b16 %v222
    %v262 = vunpack.c.l.b16 %v223
    %v263 = vunpack.c.l.b16 %v224
    %v264 = vunpack.c.l.b16 %v225
    %v265 = vunpack.c.l.b16 %v226
    %v266 = vunpack.c.l.b16 %v227
    %v267 = vunpack.c.l.b16 %v228
    %v268 = vunpack.c.l.b16 %v229
    %v269 = vpack.c.b16 %v254, %v253
    %v270 = vpack.c.b16 %v256, %v255
    %v271 = vpack.c.b16 %v258, %v257
    %v272 = vpack.c.b16 %v260, %v259
    %v273 = vpack.c.b16 %v262, %v261
    %v274 = vpack.c.b16 %v264, %v263
    %v275 = vpack.c.b16 %v266, %v265
    %v276 = vpack.c.b16 %v268, %v267
    %285 = vmatprep.subr.bf16.mxu0 0
    %286 = vmatpush1.bf16.msra.mxu0 %v269
    %287 = vmatprep.subr.bf16.mxu0 0
    %288 = vmatpush1.bf16.msra.mxu0 %v270
    %289 = vmatprep.subr.bf16.mxu0 0
    %290 = vmatpush1.bf16.msra.mxu0 %v271
    %291 = vmatprep.subr.bf16.mxu0 0
    %292 = vmatpush1.bf16.msra.mxu0 %v272
    %293 = vmatprep.subr.bf16.mxu0 0
    %294 = vmatpush1.bf16.msra.mxu0 %v273
    %295 = vmatprep.subr.bf16.mxu0 0
    %296 = vmatpush1.bf16.msra.mxu0 %v274
    %297 = vmatprep.subr.bf16.mxu0 0
    %298 = vmatpush1.bf16.msra.mxu0 %v275
    %299 = vmatprep.subr.bf16.mxu0 0
    %300 = vmatpush1.bf16.msra.mxu0 %v276
    %301 = vmatprep.subr.bf16.mxu0 0
    %302 = vmatpush1.bf16.msra.mxu0 0
    %303 = vmatprep.subr.bf16.mxu0 0
    %304 = vmatpush1.bf16.msra.mxu0 0
    %305 = vmatprep.subr.bf16.mxu0 0
    %306 = vmatpush1.bf16.msra.mxu0 0
    %307 = vmatprep.subr.bf16.mxu0 0
    %308 = vmatpush1.bf16.msra.mxu0 0
    %309 = vmatprep.subr.bf16.mxu0 0
    %310 = vmatpush1.bf16.msra.mxu0 0
    %311 = vmatprep.subr.bf16.mxu0 0
    %312 = vmatpush1.bf16.msra.mxu0 0
    %313 = vmatprep.subr.bf16.mxu0 0
    %314 = vmatpush1.bf16.msra.mxu0 0
    %315 = vmatprep.subr.bf16.mxu0 0
    %316 = vmatpush1.bf16.msra.mxu0 0
    %317 = vmatprep.mubr.bf16.mxu0 0
    %318 = vmatmul.mubr.bf16.gmra.mrb[0].mxu0 %v213
    %v319 = vpop.f32.mrb[0].mxu0
    %v320 = vadd.f32 %v235, %v319
    %v321 = vpop.f32.mrb[0].mxu0
    %v322 = vpop.f32.mrb[0].mxu0
    %v323 = vadd.f32 %v235, %v322
    %v324 = vpop.f32.mrb[0].mxu0
    %325 = vdwg.mxu0
    %v326 = vsub.f32 0.0, %v320
    %v327 = vsub.f32 0.0, %v323
    %v328 = vmul.f32 %v326, 1.442695
    %v329 = vpow.pop %v328
    %v330 = vmul.f32 %v327, 1.442695
    %v331 = vpow.pop %v330
    %v332 = vadd.f32 %v329, 1.0
    %v333 = vadd.f32 %v331, 1.0
    %v334 = vrcp.pop %v332
    %v335 = vrcp.pop %v333
    %v336 = vpack.c.bf16 %v335, %v334
    %v337 = vld [vmem:[#allocation8] sm:$0xf]
    %v338 = vld [vmem:[#allocation8 + $0x4] sm:$0xf]
    %v339 = vld [vmem:[#allocation8 + $0x8] sm:$0xf]
    %v340 = vld [vmem:[#allocation8 + $0xc] sm:$0xf]
    %v341 = vld [vmem:[#allocation8 + $0x10] sm:$0xf]
    %v342 = vld [vmem:[#allocation8 + $0x14] sm:$0xf]
    %v343 = vld [vmem:[#allocation8 + $0x18] sm:$0xf]
    %v344 = vld [vmem:[#allocation8 + $0x1c] sm:$0xf]
    %v345 = vld [vmem:[#allocation8 + $0x20] sm:$0xf]
    %v346 = vld [vmem:[#allocation8 + $0x24] sm:$0xf]
    %v347 = vld [vmem:[#allocation8 + $0x28] sm:$0xf]
    %v348 = vld [vmem:[#allocation8 + $0x2c] sm:$0xf]
    %v349 = vld [vmem:[#allocation8 + $0x30] sm:$0xf]
    %v350 = vld [vmem:[#allocation8 + $0x34] sm:$0xf]
    %v351 = vld [vmem:[#allocation8 + $0x38] sm:$0xf]
    %v352 = vld [vmem:[#allocation8 + $0x3c] sm:$0xf]
    %v353 = vld [vmem:[%s6] sm:$0x1]
    %v355 = vlaneseq
    %v356 = vshrl.u32 %v355, 7
    %v357 = vsub.s32 0, %v356
    %v358 = vrot.slane %v353, %v357
    %v376 = vunpack.c.l.b16 %v337
    %v377 = vunpack.c.l.b16 %v338
    %v378 = vunpack.c.l.b16 %v339
    %v379 = vunpack.c.l.b16 %v340
    %v380 = vunpack.c.l.b16 %v341
    %v381 = vunpack.c.l.b16 %v342
    %v382 = vunpack.c.l.b16 %v343
    %v383 = vunpack.c.l.b16 %v344
    %v384 = vunpack.c.l.b16 %v345
    %v385 = vunpack.c.l.b16 %v346
    %v386 = vunpack.c.l.b16 %v347
    %v387 = vunpack.c.l.b16 %v348
    %v388 = vunpack.c.l.b16 %v349
    %v389 = vunpack.c.l.b16 %v350
    %v390 = vunpack.c.l.b16 %v351
    %v391 = vunpack.c.l.b16 %v352
    %v392 = vpack.c.b16 %v377, %v376
    %v393 = vpack.c.b16 %v379, %v378
    %v394 = vpack.c.b16 %v381, %v380
    %v395 = vpack.c.b16 %v383, %v382
    %v396 = vpack.c.b16 %v385, %v384
    %v397 = vpack.c.b16 %v387, %v386
    %v398 = vpack.c.b16 %v389, %v388
    %v399 = vpack.c.b16 %v391, %v390
    %408 = vmatprep.subr.bf16.mxu0 0
    %409 = vmatpush1.bf16.msra.mxu0 %v392
    %410 = vmatprep.subr.bf16.mxu0 0
    %411 = vmatpush1.bf16.msra.mxu0 %v393
    %412 = vmatprep.subr.bf16.mxu0 0
    %413 = vmatpush1.bf16.msra.mxu0 %v394
    %414 = vmatprep.subr.bf16.mxu0 0
    %415 = vmatpush1.bf16.msra.mxu0 %v395
    %416 = vmatprep.subr.bf16.mxu0 0
    %417 = vmatpush1.bf16.msra.mxu0 %v396
    %418 = vmatprep.subr.bf16.mxu0 0
    %419 = vmatpush1.bf16.msra.mxu0 %v397
    %420 = vmatprep.subr.bf16.mxu0 0
    %421 = vmatpush1.bf16.msra.mxu0 %v398
    %422 = vmatprep.subr.bf16.mxu0 0
    %423 = vmatpush1.bf16.msra.mxu0 %v399
    %424 = vmatprep.subr.bf16.mxu0 0
    %425 = vmatpush1.bf16.msra.mxu0 0
    %426 = vmatprep.subr.bf16.mxu0 0
    %427 = vmatpush1.bf16.msra.mxu0 0
    %428 = vmatprep.subr.bf16.mxu0 0
    %429 = vmatpush1.bf16.msra.mxu0 0
    %430 = vmatprep.subr.bf16.mxu0 0
    %431 = vmatpush1.bf16.msra.mxu0 0
    %432 = vmatprep.subr.bf16.mxu0 0
    %433 = vmatpush1.bf16.msra.mxu0 0
    %434 = vmatprep.subr.bf16.mxu0 0
    %435 = vmatpush1.bf16.msra.mxu0 0
    %436 = vmatprep.subr.bf16.mxu0 0
    %437 = vmatpush1.bf16.msra.mxu0 0
    %438 = vmatprep.subr.bf16.mxu0 0
    %439 = vmatpush1.bf16.msra.mxu0 0
    %440 = vmatprep.mubr.bf16.mxu0 0
    %441 = vmatmul.mubr.bf16.gmra.mrb[0].mxu0 %v336
    %v442 = vpop.f32.mrb[0].mxu0
    %v443 = vadd.f32 %v358, %v442
    %v444 = vpop.f32.mrb[0].mxu0
    %v445 = vpop.f32.mrb[0].mxu0
    %v446 = vadd.f32 %v358, %v445
    %v447 = vpop.f32.mrb[0].mxu0
    %448 = vdwg.mxu0
    %v449 = vpack.c.bf16 %v446, %v443
    %v451 = vunpack.c.l.b16 %v449
    %v452 = vunpack.c.h.b16 %v449
    %v453 = vpack.c.b16 %v451, %v451
    %v454 = vpack.c.b16 %v452, %v452
    %457 = vst [vmem:[#allocation10] sm:$0xf] %v453
    %458 = vst [vmem:[#allocation10 + $0x4] sm:$0xf] %v454
    // Predicated region
    $region46: #{tpu_custom_call.1} parent=1 // pred_check
      _
    $region47: #{tpu_custom_call.1} parent=1 // pred_check_branch
      %460 = sbr.rel (0) target = $region49
    $region48: #{tpu_custom_call.1} parent=1 // pred_region
      %s462 = ssub.s32 128, 128
      %463 = vsyncadd [#allocation4], %s462
      %s464 = sshll.u32 [#allocation10], 4
      %s465 = int_to_ptr.vmem [resolvable:$true] %s464
      %470 = dma.vmem_to_hbm [thread:$0]  %s465, 128, %s7, [#allocation4], 64, 64, 4
    $region49: #{tpu_custom_call.1} parent=1 // pred_fallthru
      _
    // Predicated region
    $region50: #{tpu_custom_call.1} parent=1 // pred_check
      _
    $region51: #{tpu_custom_call.1} parent=1 // pred_check_branch
      %472 = sbr.rel (0) target = $region53
    $region52: #{tpu_custom_call.1} parent=1 // pred_region
      %473 = dma.done [#allocation4], 128
    $region53: #{tpu_custom_call.1} parent=1 // pred_fallthru
      _
    %474 = vsyncpa [#allocation3], 1
    %475 = vsyncpa [#allocation6], 1
    %476 = vsyncpa [#allocation9], 1
    %477 = vsyncpa [#allocation4], 1

</llo_original>
